<compile_context>
chip_gen: v7x
topology: tpu7x:2x2x1
jax: 0.10.0
libtpu: 0.0.40
codegen_flags: <defaults>
</compile_context>

<pallas_src>
import numpy as np
import jax
import jax.numpy as jnp
from jax.experimental import pallas as pl
from jax.experimental.pallas import tpu as pltpu

LAMBD = 1e-4
LANES = 128
MAX_BLOCK_ROWS = 1024  # 1024*128*4B = 512 KiB per input buffer; x2 inputs x2 bufs = 2 MiB
                       # -> comfortably inside v7x's 32 MiB scoped-VMEM default.


def _hadamard(n: int) -> np.ndarray:
    """Sylvester Hadamard matrix; n must be a power of 2."""
    H = np.array([[1.0]], dtype=np.float32)
    while H.shape[0] < n:
        H = np.block([[H, H], [H, -H]]).astype(np.float32)
    return H


def make_hash_targets(n_class: int, bit: int) -> jnp.ndarray:
    H_K = _hadamard(bit)
    H_2K = np.concatenate((H_K, -H_K), axis=0)
    assert H_2K.shape[0] >= n_class, "random refill branch not needed at these sizes"
    return jnp.asarray(H_2K[:n_class], dtype=jnp.float32)


def _csq_partial_kernel(u_ref, hc_ref, out_ref):
    u = u_ref[...]            # (block_rows, 128) f32, lane-dense
    hc = hc_ref[...]          # (block_rows, 128) f32, values in {-1, +1} (pad = +1)

    two_u = 2.0 * u
    # p = 0.5*(tanh(u)+1) == sigmoid(2u).  One exp + one log per element (EUP),
    # instead of tanh + 2x log in the naive formulation.
    e = jnp.exp(-jnp.abs(two_u))                                # exp(-2|u|)
    log_p = -(jnp.maximum(-two_u, 0.0) + jnp.log(1.0 + e))      # log sigmoid(2u)
    log_1mp = log_p - two_u                                     # log(1 - sigmoid(2u))
    # keep torch.nn.BCELoss's clamp-at--100 for parity (cheap VPU max)
    log_p = jnp.maximum(log_p, -100.0)
    log_1mp = jnp.maximum(log_1mp, -100.0)

    t = 0.5 * (hc + 1.0)                                        # target in {0, 1}
    bce = -(t * log_p + (1.0 - t) * log_1mp)

    # (|tanh(u)| - 1)^2 = (2e / (1+e))^2, reusing e; reciprocal goes to the free EUP slot.
    d = 2.0 * e * pl.reciprocal(1.0 + e, approx=True)
    contrib = bce + LAMBD * (d * d)                             # fused loss contribution

    # Reduce block_rows -> 8 sublanes with VPU adds only (no cross-lane XLU reduce);
    # the reshape splits sublanes on the natural (8,128) tile, so it is layout-preserving.
    partial = jnp.sum(contrib.reshape(-1, 8, LANES), axis=0)    # (8, 128)
    out_ref[0] = partial


def csq_loss(u: jnp.ndarray, y: jnp.ndarray, hash_targets: jnp.ndarray) -> jnp.ndarray:
    n, bit = u.shape
    total = n * bit

    # Single-label center lookup: y is one-hot, so the matmul is an exact gather.
    # TODO(synk): multi-label branch (y @ targets with random-center fill) not implemented.
    hc = jnp.dot(y.astype(jnp.float32), hash_targets.astype(jnp.float32),
                 preferred_element_type=jnp.float32)            # (N, bit)

    # Lane-dense repack in the wrapper (not in-kernel): flatten to (rows, 128).
    rows = -(-total // LANES)
    rows = -(-rows // 8) * 8                                    # multiple of 8 sublanes
    block_rows = min(MAX_BLOCK_ROWS, rows)
    padded_rows = -(-rows // block_rows) * block_rows
    n_blocks = padded_rows // block_rows
    padded_total = padded_rows * LANES
    pad = padded_total - total

    # Padding (u=50, hc=+1) contributes exactly 0 to both loss terms:
    # e = exp(-100) -> 0, so bce = 0 and (|tanh|-1)^2 = 0.
    u_flat = jnp.pad(u.astype(jnp.float32).reshape(-1), (0, pad),
                     constant_values=50.0).reshape(padded_rows, LANES)
    hc_flat = jnp.pad(hc.reshape(-1), (0, pad),
                      constant_values=1.0).reshape(padded_rows, LANES)

    partials = pl.pallas_call(
        _csq_partial_kernel,
        out_shape=jax.ShapeDtypeStruct((n_blocks, 8, LANES), jnp.float32),
        grid=(n_blocks,),
        in_specs=[
            pl.BlockSpec((block_rows, LANES), lambda i: (i, 0)),
            pl.BlockSpec((block_rows, LANES), lambda i: (i, 0)),
        ],
        out_specs=pl.BlockSpec((1, 8, LANES), lambda i: (i, 0, 0)),
        compiler_params=pltpu.CompilerParams(
            dimension_semantics=("parallel",),
        ),
        cost_estimate=pl.CostEstimate(
            flops=16 * padded_total,
            transcendentals=3 * padded_total,
            bytes_accessed=2 * padded_total * 4 + n_blocks * 8 * LANES * 4,
        ),
    )(u_flat, hc_flat)

    # Tiny final reduce in the wrapper keeps the grid axis "parallel" (megacore-friendly).
    return jnp.sum(partials) / jnp.float32(total)


def _reference_loss(u, y, hash_targets):
    """Pure-JAX reference matching the PyTorch forward (tanh + clamped-log BCE)."""
    u_t = jnp.tanh(u)
    hc = hash_targets[jnp.argmax(y, axis=1)]
    p = 0.5 * (u_t + 1.0)
    t = 0.5 * (hc + 1.0)
    log_p = jnp.maximum(jnp.log(p), -100.0)
    log_1mp = jnp.maximum(jnp.log(1.0 - p), -100.0)
    center_loss = jnp.mean(-(t * log_p + (1.0 - t) * log_1mp))
    q_loss = jnp.mean((jnp.abs(u_t) - 1.0) ** 2)
    return center_loss + LAMBD * q_loss


if __name__ == "__main__":
    N, NUM_CLASSES, BIT = 8, 10, 32

    key = jax.random.PRNGKey(0)
    k_u, k_lbl = jax.random.split(key)

    # network outputs (pre-tanh hash logits)
    u = jax.random.normal(k_u, (N, BIT), dtype=jnp.float32) * 1.5
    # one-hot labels
    labels = jax.random.randint(k_lbl, (N,), 0, NUM_CLASSES)
    y = jax.nn.one_hot(labels, NUM_CLASSES, dtype=jnp.float32)
    # ind is unused by the forward pass
    ind = jnp.arange(N, dtype=jnp.int32)

    hash_targets = make_hash_targets(NUM_CLASSES, BIT)

    loss = csq_loss(u, y, hash_targets)
    jax.block_until_ready(loss)

    ref = _reference_loss(u, y, hash_targets)
    np.testing.assert_allclose(float(loss), float(ref), rtol=2e-3, atol=1e-6)
    print("KERNEL_OK")
</pallas_src>

<mosaic_0001>
module attributes {stable_mosaic.version = 11 : i64} {
  func.func @_csq_partial_kernel(%arg0: i32, %arg1: memref<8x128xf32, #tpu.memory_space<vmem>>, %arg2: memref<8x128xf32, #tpu.memory_space<vmem>>, %arg3: memref<1x8x128xf32, #tpu.memory_space<vmem>>) attributes {dimension_semantics = [#tpu.dimension_semantics<parallel>], iteration_bounds = array<i64: 1>, scalar_prefetch = 0 : i64, scratch_operands = 0 : i64, tpu.core_type = #tpu.core_type<tc>, window_params = [{transform_indices = @transform_0, window_bounds = array<i64: 8, 128>}, {transform_indices = @transform_1, window_bounds = array<i64: 8, 128>}, {transform_indices = @transform_2, window_bounds = array<i64: 1, 8, 128>}]} {
    %c0 = arith.constant 0 : index
    %c0_0 = arith.constant 0 : index
    %0 = vector.load %arg1[%c0, %c0_0] : memref<8x128xf32, #tpu.memory_space<vmem>>, vector<8x128xf32>
    %c0_1 = arith.constant 0 : index
    %c0_2 = arith.constant 0 : index
    %1 = vector.load %arg2[%c0_1, %c0_2] : memref<8x128xf32, #tpu.memory_space<vmem>>, vector<8x128xf32>
    %cst = arith.constant 2.000000e+00 : f32
    %2 = vector.broadcast %cst : f32 to vector<8x128xf32>
    %3 = arith.mulf %2, %0 : vector<8x128xf32>
    %4 = math.absf %3 : vector<8x128xf32>
    %cst_3 = arith.constant 0.000000e+00 : f32
    %5 = vector.broadcast %cst_3 : f32 to vector<8x128xf32>
    %6 = arith.subf %5, %4 : vector<8x128xf32>
    %7 = math.exp %6 : vector<8x128xf32>
    %cst_4 = arith.constant 0.000000e+00 : f32
    %8 = vector.broadcast %cst_4 : f32 to vector<8x128xf32>
    %9 = arith.subf %8, %3 : vector<8x128xf32>
    %cst_5 = arith.constant 0.000000e+00 : f32
    %10 = vector.broadcast %cst_5 : f32 to vector<8x128xf32>
    %11 = arith.maximumf %9, %10 : vector<8x128xf32>
    %cst_6 = arith.constant 1.000000e+00 : f32
    %12 = vector.broadcast %cst_6 : f32 to vector<8x128xf32>
    %13 = arith.addf %12, %7 : vector<8x128xf32>
    %14 = math.log %13 : vector<8x128xf32>
    %15 = arith.addf %11, %14 : vector<8x128xf32>
    %cst_7 = arith.constant 0.000000e+00 : f32
    %16 = vector.broadcast %cst_7 : f32 to vector<8x128xf32>
    %17 = arith.subf %16, %15 : vector<8x128xf32>
    %18 = arith.subf %17, %3 : vector<8x128xf32>
    %cst_8 = arith.constant -1.000000e+02 : f32
    %19 = vector.broadcast %cst_8 : f32 to vector<8x128xf32>
    %20 = arith.maximumf %17, %19 : vector<8x128xf32>
    %cst_9 = arith.constant -1.000000e+02 : f32
    %21 = vector.broadcast %cst_9 : f32 to vector<8x128xf32>
    %22 = arith.maximumf %18, %21 : vector<8x128xf32>
    %cst_10 = arith.constant 1.000000e+00 : f32
    %23 = vector.broadcast %cst_10 : f32 to vector<8x128xf32>
    %24 = arith.addf %1, %23 : vector<8x128xf32>
    %cst_11 = arith.constant 5.000000e-01 : f32
    %25 = vector.broadcast %cst_11 : f32 to vector<8x128xf32>
    %26 = arith.mulf %25, %24 : vector<8x128xf32>
    %27 = arith.mulf %26, %20 : vector<8x128xf32>
    %cst_12 = arith.constant 1.000000e+00 : f32
    %28 = vector.broadcast %cst_12 : f32 to vector<8x128xf32>
    %29 = arith.subf %28, %26 : vector<8x128xf32>
    %30 = arith.mulf %29, %22 : vector<8x128xf32>
    %31 = arith.addf %27, %30 : vector<8x128xf32>
    %cst_13 = arith.constant 0.000000e+00 : f32
    %32 = vector.broadcast %cst_13 : f32 to vector<8x128xf32>
    %33 = arith.subf %32, %31 : vector<8x128xf32>
    %cst_14 = arith.constant 2.000000e+00 : f32
    %34 = vector.broadcast %cst_14 : f32 to vector<8x128xf32>
    %35 = arith.mulf %34, %7 : vector<8x128xf32>
    %cst_15 = arith.constant 1.000000e+00 : f32
    %36 = vector.broadcast %cst_15 : f32 to vector<8x128xf32>
    %37 = arith.addf %36, %7 : vector<8x128xf32>
    %38 = tpu.reciprocal %37 {approx = true} : vector<8x128xf32> -> vector<8x128xf32>
    %39 = arith.mulf %35, %38 : vector<8x128xf32>
    %40 = arith.mulf %39, %39 : vector<8x128xf32>
    %cst_16 = arith.constant 9.99999974E-5 : f32
    %41 = vector.broadcast %cst_16 : f32 to vector<8x128xf32>
    %42 = arith.mulf %41, %40 : vector<8x128xf32>
    %43 = arith.addf %33, %42 : vector<8x128xf32>
    %44 = vector.shape_cast %43 : vector<8x128xf32> to vector<1x8x128xf32>
    %cst_17 = arith.constant dense<0.000000e+00> : vector<8x128xf32>
    %45 = vector.multi_reduction <add>, %44, %cst_17 [0] : vector<1x8x128xf32> to vector<8x128xf32>
    %c0_18 = arith.constant 0 : index
    %c0_19 = arith.constant 0 : index
    %c0_20 = arith.constant 0 : index
    %46 = vector.load %arg3[%c0_18, %c0_19, %c0_20] : memref<1x8x128xf32, #tpu.memory_space<vmem>>, vector<1x8x128xf32>
    %47 = vector.shape_cast %46 : vector<1x8x128xf32> to vector<8x128xf32>
    %48 = vector.shape_cast %45 : vector<8x128xf32> to vector<1x8x128xf32>
    tpu.vector_store %arg3[%c0_18, %c0_19, %c0_20], %48 {strides = array<i32>} : memref<1x8x128xf32, #tpu.memory_space<vmem>>, vector<1x8x128xf32>,
    return
  }
  func.func @transform_0(%arg0: i32) -> (i32, i32) {
    %c0_i32 = arith.constant 0 : i32
    %c0_i32_0 = arith.constant 0 : i32
    return %arg0, %c0_i32 : i32, i32
  }
  func.func @transform_1(%arg0: i32) -> (i32, i32) {
    %c0_i32 = arith.constant 0 : i32
    %c0_i32_0 = arith.constant 0 : i32
    return %arg0, %c0_i32 : i32, i32
  }
  func.func @transform_2(%arg0: i32) -> (i32, i32, i32) {
    %c0_i32 = arith.constant 0 : i32
    %c0_i32_0 = arith.constant 0 : i32
    %c0_i32_1 = arith.constant 0 : i32
    return %arg0, %c0_i32, %c0_i32_0 : i32, i32, i32
  }
}

</mosaic_0001>

<llo_original>
// kernel: tpu_custom_call.1
$region0: #{tpu_custom_call.1}
  #allocation0 [shape = 'u32[]', space=smem, size = 0x4, offset = 0x4, fixed_abs, tag = 'smem constant byte address 0x4 - core index']
  #allocation1 [shape = 'u32[144,128]{1,0:T(1,128)}', space=vmem, size = 0x12000, scoped, tag = 'internal scratch']
  %s0 = inlined_call_operand.hbm [shape: f32[8,128], index: 0, kind: input, shape index: {}]
  %s1 = inlined_call_operand.hbm [shape: f32[8,128], index: 1, kind: input, shape index: {}]
  %s2 = inlined_call_operand.hbm [shape: f32[1,8,128], index: 2, kind: output, shape index: {}]
  %s3 = sld [smem:[#allocation0]]
  $region26: #{tpu_custom_call.1} parent=0
    _
  %s5 = ssub.s32 1, %s3
  %s6 = scalar_select 0, %s5, %s3
  $region1: #{tpu_custom_call.1} parent=0
    #allocation2 [shape = 'u8[4096]{0}', space=vmem, size = 0x1000, scoped, tag = 'input window, operand 0, single buffered']
    #allocation3 [shape = 's32[1]{0}', space=sflag, size = 0x4, scoped, tag = 'scoped memory for tpu_custom_call.1']
    #allocation4 [shape = 's32[1]{0}', space=sflag, size = 0x4, scoped, tag = 'scoped memory for tpu_custom_call.1']
    #allocation5 [shape = 'u8[4096]{0}', space=vmem, size = 0x1000, scoped, tag = 'input window, operand 1, single buffered']
    #allocation6 [shape = 's32[1]{0}', space=sflag, size = 0x4, scoped, tag = 'scoped memory for tpu_custom_call.1']
    #allocation7 [shape = 'u8[4096]{0}', space=vmem, size = 0x1000, scoped, tag = 'output window, operand 0, single buffered']
    %7 = vsyncpa [#allocation3], 0
    %8 = vsyncpa [#allocation6], 0
    %9 = vsyncpa [#allocation4], 0
    // Predicated region
    $region2: #{tpu_custom_call.1} parent=1 // pred_check
      _
    $region3: #{tpu_custom_call.1} parent=1 // pred_check_branch
      %11 = sbr.rel (0) target = $region5
    $region4: #{tpu_custom_call.1} parent=1 // pred_region
      %s13 = ssub.s32 128, 128
      %14 = vsyncadd [#allocation3], %s13
      %s16 = sshll.u32 [#allocation2], 4
      %s17 = int_to_ptr.vmem [resolvable:$true] %s16
      %19 = dma.hbm_to_vmem [thread:$0]  %s0, 128, %s17, [#allocation3]
    $region5: #{tpu_custom_call.1} parent=1 // pred_fallthru
      _
    // Predicated region
    $region6: #{tpu_custom_call.1} parent=1 // pred_check
      _
    $region7: #{tpu_custom_call.1} parent=1 // pred_check_branch
      %21 = sbr.rel (0) target = $region9
    $region8: #{tpu_custom_call.1} parent=1 // pred_region
      %s23 = ssub.s32 128, 128
      %24 = vsyncadd [#allocation6], %s23
      %s26 = sshll.u32 [#allocation5], 4
      %s27 = int_to_ptr.vmem [resolvable:$true] %s26
      %29 = dma.hbm_to_vmem [thread:$0]  %s1, 128, %s27, [#allocation6]
    $region9: #{tpu_custom_call.1} parent=1 // pred_fallthru
      _
    // Predicated region
    $region10: #{tpu_custom_call.1} parent=1 // pred_check
      _
    $region11: #{tpu_custom_call.1} parent=1 // pred_check_branch
      %31 = sbr.rel (0) target = $region13
    $region12: #{tpu_custom_call.1} parent=1 // pred_region
      %32 = dma.done [#allocation3], 128
    $region13: #{tpu_custom_call.1} parent=1 // pred_fallthru
      _
    // Predicated region
    $region14: #{tpu_custom_call.1} parent=1 // pred_check
      _
    $region15: #{tpu_custom_call.1} parent=1 // pred_check_branch
      %34 = sbr.rel (0) target = $region17
    $region16: #{tpu_custom_call.1} parent=1 // pred_region
      %35 = dma.done [#allocation6], 128
    $region17: #{tpu_custom_call.1} parent=1 // pred_fallthru
      _
    %v36 = vld [vmem:[#allocation2] sm:$0xff]
    %v37 = vld [vmem:[#allocation5] sm:$0xff]
    %v38 = vmul.f32 %v36, 2.0
    %v39 = vand.u32 2147483647, %v38
    %v40 = vsub.f32 0.0, %v39
    %v41 = vmul.f32 %v40, 1.442695
    %v42 = vpow.pop %v41
    %v43 = vsub.f32 0.0, %v38
    %v44 = vmax.f32 %v43, 0.0
    %v45 = vadd.f32 %v42, 1.0
    %v46 = vlog2.pop %v45
    %v47 = vmul.f32 %v46, 0.6931472
    %v48 = vadd.f32 %v44, %v47
    %v49 = vsub.f32 0.0, %v48
    %v50 = vsub.f32 %v49, %v38
    %v51 = vmax.f32 %v49, -100.0
    %v52 = vmax.f32 %v50, -100.0
    %v53 = vadd.f32 %v37, 1.0
    %v54 = vmul.f32 %v53, 0.5
    %v55 = vmul.f32 %v54, %v51
    %v56 = vsub.f32 1.0, %v54
    %v57 = vmul.f32 %v56, %v52
    %v58 = vadd.f32 %v55, %v57
    %v59 = vsub.f32 0.0, %v58
    %v60 = vmul.f32 %v42, 2.0
    %v61 = vrcp.pop %v45
    %v62 = vmul.f32 %v60, %v61
    %v63 = vmul.f32 %v62, %v62
    %v64 = vmul.f32 %v63, 0.0001
    %v65 = vadd.f32 %v59, %v64
    %v66 = vadd.f32 %v65, 0.0
    %67 = vst [vmem:[#allocation7] sm:$0xff] %v66
    // Predicated region
    $region18: #{tpu_custom_call.1} parent=1 // pred_check
      _
    $region19: #{tpu_custom_call.1} parent=1 // pred_check_branch
      %69 = sbr.rel (0) target = $region21
    $region20: #{tpu_custom_call.1} parent=1 // pred_region
      %s71 = ssub.s32 128, 128
      %72 = vsyncadd [#allocation4], %s71
      %s74 = sshll.u32 [#allocation7], 4
      %s75 = int_to_ptr.vmem [resolvable:$true] %s74
      %77 = dma.vmem_to_hbm [thread:$0]  %s75, 128, %s2, [#allocation4]
    $region21: #{tpu_custom_call.1} parent=1 // pred_fallthru
      _
    // Predicated region
    $region22: #{tpu_custom_call.1} parent=1 // pred_check
      _
    $region23: #{tpu_custom_call.1} parent=1 // pred_check_branch
      %79 = sbr.rel (0) target = $region25
    $region24: #{tpu_custom_call.1} parent=1 // pred_region
      %80 = dma.done [#allocation4], 128
    $region25: #{tpu_custom_call.1} parent=1 // pred_fallthru
      _
    %81 = vsyncpa [#allocation3], 1
    %82 = vsyncpa [#allocation6], 1
    %83 = vsyncpa [#allocation4], 1

</llo_original>
